<compile_context>
chip_gen: v7x
topology: tpu7x:2x2x1
jax: 0.10.0
libtpu: 0.0.40
codegen_flags: <defaults>
</compile_context>

<pallas_src>
import functools

import jax
import jax.numpy as jnp
from jax.experimental import pallas as pl
from jax.experimental.pallas import tpu as pltpu

# Fixed model dimensions (from the PyTorch module).
D_IN = 2
D_H1 = 10
D_H2 = 10
D_OUT = 1

LANES = 128            # lane width of a vreg
MAX_TILE_S = 1024      # sublane-tile cap -> 1024*128 = 131072 batch elems per grid step


def _round_up(a: int, b: int) -> int:
    return ((a + b - 1) // b) * b


def _mlp_kernel(x_ref, w1_ref, b1_ref, w23_ref, b23_ref, o_ref):
    """x_ref: (D_IN, TILE_S, 128) VMEM block (batch on sublanes+lanes, fully dense).

    Params live as flat f32 vectors in SMEM.  Layers 2+3 are pre-folded into (w23, b23),
    so the body is: h1_j = relu(x0*w1[0,j] + x1*w1[1,j] + b1[j]);  out = sum_j h1_j*w23[j] + b23.
    All compute is unrolled scalar*vector FMAs on the VPU.
    """
    x0 = x_ref[0]  # (TILE_S, 128) dense slab
    x1 = x_ref[1]

    out = None
    for j in range(D_H1):
        # Layer 1 neuron j: Linear(2 -> 1) + ReLU.  w1 flat layout: w1[k, j] -> w1_ref[k*D_H1 + j]
        h = jnp.maximum(x0 * w1_ref[0 * D_H1 + j] + x1 * w1_ref[1 * D_H1 + j] + b1_ref[j], 0.0)
        # Folded Linear(10 -> 1) contribution.
        term = h * w23_ref[j]
        out = term if out is None else out + term
    out = out + b23_ref[0]

    o_ref[0] = out.astype(o_ref.dtype)  # (TILE_S, 128) dense, unmasked store


@functools.partial(jax.jit, static_argnames=())
def circular_model_forward(x, params):
    """x: (N, 2) float32.  params: dict of weights/biases.  Returns (N, 1) float32."""
    n = x.shape[0]

    # --- Fold Linear(10->10) and Linear(10->1) into a single Linear(10->1) (exact, no act between).
    w2 = params["w2"].astype(jnp.float32)          # (10, 10)  (in, out)
    w3 = params["w3"].astype(jnp.float32)          # (10, 1)
    b2 = params["b2"].astype(jnp.float32)          # (10,)
    b3 = params["b3"].astype(jnp.float32)          # (1,)
    w23f = (w2 @ w3).reshape(-1)                   # (10,)
    b23f = (b2 @ w3 + b3).reshape(-1)              # (1,)
    w1f = params["w1"].astype(jnp.float32).reshape(-1)  # (2*10,) row-major (in, out)
    b1f = params["b1"].astype(jnp.float32).reshape(-1)  # (10,)

    # --- Feature-major, sublane/lane-dense layout: (D_IN, S, 128) with S = ceil(N/128).
    # cast + transpose + pad(<=127) + reshape fuse into one XLA pass; padded lanes sliced off below.
    n_pad = _round_up(max(n, 1), LANES)
    x_t = x.astype(jnp.float32).T                  # (2, N)
    if n_pad != n:
        x_t = jnp.pad(x_t, ((0, 0), (0, n_pad - n)))
    s_total = n_pad // LANES
    x3 = x_t.reshape(D_IN, s_total, LANES)

    # --- Sublane-tile size: big (amortize ~0.35us/step), multiple of 8, and small enough that the
    # grid has >= 2 steps (v7x megacore) when the batch allows it.
    if s_total <= 8:
        tile_s = s_total                           # single block == full dim (valid for any size)
    else:
        tile_s = min(MAX_TILE_S, _round_up(pl.cdiv(s_total, 2), 8))
    grid = (pl.cdiv(s_total, tile_s),)

    smem = lambda: pl.BlockSpec(memory_space=pltpu.MemorySpace.SMEM)

    out3 = pl.pallas_call(
        _mlp_kernel,
        out_shape=jax.ShapeDtypeStruct((D_OUT, s_total, LANES), jnp.float32),
        grid=grid,
        in_specs=[
            pl.BlockSpec((D_IN, tile_s, LANES), lambda i: (0, i, 0)),  # x: pipelined batch tiles
            smem(), smem(), smem(), smem(),                            # params: resident SMEM
        ],
        out_specs=pl.BlockSpec((D_OUT, tile_s, LANES), lambda i: (0, i, 0)),
        compiler_params=pltpu.CompilerParams(
            dimension_semantics=("parallel",),  # shard batch tiles across TCs on v7x
        ),
    )(x3, w1f, b1f, w23f, b23f)

    return out3.reshape(n_pad)[:n].reshape(n, 1)


def init_params(key):
    """Deterministic init mimicking PyTorch's Linear default (uniform +/- 1/sqrt(fan_in))."""
    def linear(key, fan_in, fan_out):
        kw, kb = jax.random.split(key)
        bound = 1.0 / jnp.sqrt(fan_in)
        w = jax.random.uniform(kw, (fan_in, fan_out), jnp.float32, -bound, bound)
        b = jax.random.uniform(kb, (fan_out,), jnp.float32, -bound, bound)
        return w, b

    k1, k2, k3 = jax.random.split(key, 3)
    w1, b1 = linear(k1, D_IN, D_H1)
    w2, b2 = linear(k2, D_H1, D_H2)
    w3, b3 = linear(k3, D_H2, D_OUT)
    return {"w1": w1, "b1": b1, "w2": w2, "b2": b2, "w3": w3, "b3": b3}


def _reference(x, p):
    h = jnp.maximum(x @ p["w1"] + p["b1"], 0.0)
    h = h @ p["w2"] + p["b2"]
    return h @ p["w3"] + p["b3"]


if __name__ == "__main__":
    key = jax.random.PRNGKey(0)
    kx, kp = jax.random.split(key)

    batch = 8
    x = jax.random.normal(kx, (batch, 2), jnp.float32)
    params = init_params(kp)

    out = jax.block_until_ready(circular_model_forward(x, params))
    ref = _reference(x, params)

    assert out.shape == (batch, 1)
    assert jnp.allclose(out, ref, atol=1e-5, rtol=1e-5), "mismatch vs pure-JAX reference"

    # Second shape to exercise the multi-step grid / partial trailing block path.
    x2 = jax.random.normal(kx, (3000, 2), jnp.float32)
    out2 = jax.block_until_ready(circular_model_forward(x2, params))
    assert out2.shape == (3000, 1)
    assert jnp.allclose(out2, _reference(x2, params), atol=1e-5, rtol=1e-5)

    print("KERNEL_OK")
</pallas_src>

<mosaic_0001>
module attributes {stable_mosaic.version = 11 : i64} {
  func.func @_mlp_kernel(%arg0: i32, %arg1: memref<2x1x128xf32, #tpu.memory_space<vmem>>, %arg2: memref<20xf32, #tpu.memory_space<smem>>, %arg3: memref<10xf32, #tpu.memory_space<smem>>, %arg4: memref<10xf32, #tpu.memory_space<smem>>, %arg5: memref<1xf32, #tpu.memory_space<smem>>, %arg6: memref<1x1x128xf32, #tpu.memory_space<vmem>>) attributes {dimension_semantics = [#tpu.dimension_semantics<parallel>], iteration_bounds = array<i64: 1>, scalar_prefetch = 0 : i64, scratch_operands = 0 : i64, tpu.core_type = #tpu.core_type<tc>, window_params = [{transform_indices = @transform_0, window_bounds = array<i64: 2, 1, 128>}, {transform_indices = @transform_1, window_bounds = array<i64: 20>}, {transform_indices = @transform_2, window_bounds = array<i64: 10>}, {transform_indices = @transform_3, window_bounds = array<i64: 10>}, {transform_indices = @transform_4, window_bounds = array<i64: 1>}, {transform_indices = @transform_5, window_bounds = array<i64: 1, 1, 128>}]} {
    %c0 = arith.constant 0 : index
    %c0_0 = arith.constant 0 : index
    %c0_1 = arith.constant 0 : index
    %0 = vector.load %arg1[%c0, %c0_0, %c0_1] : memref<2x1x128xf32, #tpu.memory_space<vmem>>, vector<1x1x128xf32>
    %1 = vector.shape_cast %0 : vector<1x1x128xf32> to vector<1x128xf32>
    %c1 = arith.constant 1 : index
    %c0_2 = arith.constant 0 : index
    %c0_3 = arith.constant 0 : index
    %2 = vector.load %arg1[%c1, %c0_2, %c0_3] : memref<2x1x128xf32, #tpu.memory_space<vmem>>, vector<1x1x128xf32>
    %3 = vector.shape_cast %2 : vector<1x1x128xf32> to vector<1x128xf32>
    %c0_4 = arith.constant 0 : index
    %4 = memref.load %arg2[%c0_4] : memref<20xf32, #tpu.memory_space<smem>>
    %5 = vector.broadcast %4 : f32 to vector<1x128xf32>
    %6 = arith.mulf %1, %5 : vector<1x128xf32>
    %c10 = arith.constant 10 : index
    %7 = memref.load %arg2[%c10] : memref<20xf32, #tpu.memory_space<smem>>
    %8 = vector.broadcast %7 : f32 to vector<1x128xf32>
    %9 = arith.mulf %3, %8 : vector<1x128xf32>
    %10 = arith.addf %6, %9 : vector<1x128xf32>
    %c0_5 = arith.constant 0 : index
    %11 = memref.load %arg3[%c0_5] : memref<10xf32, #tpu.memory_space<smem>>
    %12 = vector.broadcast %11 : f32 to vector<1x128xf32>
    %13 = arith.addf %10, %12 : vector<1x128xf32>
    %cst = arith.constant 0.000000e+00 : f32
    %14 = vector.broadcast %cst : f32 to vector<1x128xf32>
    %15 = arith.maximumf %13, %14 : vector<1x128xf32>
    %c0_6 = arith.constant 0 : index
    %16 = memref.load %arg4[%c0_6] : memref<10xf32, #tpu.memory_space<smem>>
    %17 = vector.broadcast %16 : f32 to vector<1x128xf32>
    %18 = arith.mulf %15, %17 : vector<1x128xf32>
    %c1_7 = arith.constant 1 : index
    %19 = memref.load %arg2[%c1_7] : memref<20xf32, #tpu.memory_space<smem>>
    %20 = vector.broadcast %19 : f32 to vector<1x128xf32>
    %21 = arith.mulf %1, %20 : vector<1x128xf32>
    %c11 = arith.constant 11 : index
    %22 = memref.load %arg2[%c11] : memref<20xf32, #tpu.memory_space<smem>>
    %23 = vector.broadcast %22 : f32 to vector<1x128xf32>
    %24 = arith.mulf %3, %23 : vector<1x128xf32>
    %25 = arith.addf %21, %24 : vector<1x128xf32>
    %c1_8 = arith.constant 1 : index
    %26 = memref.load %arg3[%c1_8] : memref<10xf32, #tpu.memory_space<smem>>
    %27 = vector.broadcast %26 : f32 to vector<1x128xf32>
    %28 = arith.addf %25, %27 : vector<1x128xf32>
    %cst_9 = arith.constant 0.000000e+00 : f32
    %29 = vector.broadcast %cst_9 : f32 to vector<1x128xf32>
    %30 = arith.maximumf %28, %29 : vector<1x128xf32>
    %c1_10 = arith.constant 1 : index
    %31 = memref.load %arg4[%c1_10] : memref<10xf32, #tpu.memory_space<smem>>
    %32 = vector.broadcast %31 : f32 to vector<1x128xf32>
    %33 = arith.mulf %30, %32 : vector<1x128xf32>
    %34 = arith.addf %18, %33 : vector<1x128xf32>
    %c2 = arith.constant 2 : index
    %35 = memref.load %arg2[%c2] : memref<20xf32, #tpu.memory_space<smem>>
    %36 = vector.broadcast %35 : f32 to vector<1x128xf32>
    %37 = arith.mulf %1, %36 : vector<1x128xf32>
    %c12 = arith.constant 12 : index
    %38 = memref.load %arg2[%c12] : memref<20xf32, #tpu.memory_space<smem>>
    %39 = vector.broadcast %38 : f32 to vector<1x128xf32>
    %40 = arith.mulf %3, %39 : vector<1x128xf32>
    %41 = arith.addf %37, %40 : vector<1x128xf32>
    %c2_11 = arith.constant 2 : index
    %42 = memref.load %arg3[%c2_11] : memref<10xf32, #tpu.memory_space<smem>>
    %43 = vector.broadcast %42 : f32 to vector<1x128xf32>
    %44 = arith.addf %41, %43 : vector<1x128xf32>
    %cst_12 = arith.constant 0.000000e+00 : f32
    %45 = vector.broadcast %cst_12 : f32 to vector<1x128xf32>
    %46 = arith.maximumf %44, %45 : vector<1x128xf32>
    %c2_13 = arith.constant 2 : index
    %47 = memref.load %arg4[%c2_13] : memref<10xf32, #tpu.memory_space<smem>>
    %48 = vector.broadcast %47 : f32 to vector<1x128xf32>
    %49 = arith.mulf %46, %48 : vector<1x128xf32>
    %50 = arith.addf %34, %49 : vector<1x128xf32>
    %c3 = arith.constant 3 : index
    %51 = memref.load %arg2[%c3] : memref<20xf32, #tpu.memory_space<smem>>
    %52 = vector.broadcast %51 : f32 to vector<1x128xf32>
    %53 = arith.mulf %1, %52 : vector<1x128xf32>
    %c13 = arith.constant 13 : index
    %54 = memref.load %arg2[%c13] : memref<20xf32, #tpu.memory_space<smem>>
    %55 = vector.broadcast %54 : f32 to vector<1x128xf32>
    %56 = arith.mulf %3, %55 : vector<1x128xf32>
    %57 = arith.addf %53, %56 : vector<1x128xf32>
    %c3_14 = arith.constant 3 : index
    %58 = memref.load %arg3[%c3_14] : memref<10xf32, #tpu.memory_space<smem>>
    %59 = vector.broadcast %58 : f32 to vector<1x128xf32>
    %60 = arith.addf %57, %59 : vector<1x128xf32>
    %cst_15 = arith.constant 0.000000e+00 : f32
    %61 = vector.broadcast %cst_15 : f32 to vector<1x128xf32>
    %62 = arith.maximumf %60, %61 : vector<1x128xf32>
    %c3_16 = arith.constant 3 : index
    %63 = memref.load %arg4[%c3_16] : memref<10xf32, #tpu.memory_space<smem>>
    %64 = vector.broadcast %63 : f32 to vector<1x128xf32>
    %65 = arith.mulf %62, %64 : vector<1x128xf32>
    %66 = arith.addf %50, %65 : vector<1x128xf32>
    %c4 = arith.constant 4 : index
    %67 = memref.load %arg2[%c4] : memref<20xf32, #tpu.memory_space<smem>>
    %68 = vector.broadcast %67 : f32 to vector<1x128xf32>
    %69 = arith.mulf %1, %68 : vector<1x128xf32>
    %c14 = arith.constant 14 : index
    %70 = memref.load %arg2[%c14] : memref<20xf32, #tpu.memory_space<smem>>
    %71 = vector.broadcast %70 : f32 to vector<1x128xf32>
    %72 = arith.mulf %3, %71 : vector<1x128xf32>
    %73 = arith.addf %69, %72 : vector<1x128xf32>
    %c4_17 = arith.constant 4 : index
    %74 = memref.load %arg3[%c4_17] : memref<10xf32, #tpu.memory_space<smem>>
    %75 = vector.broadcast %74 : f32 to vector<1x128xf32>
    %76 = arith.addf %73, %75 : vector<1x128xf32>
    %cst_18 = arith.constant 0.000000e+00 : f32
    %77 = vector.broadcast %cst_18 : f32 to vector<1x128xf32>
    %78 = arith.maximumf %76, %77 : vector<1x128xf32>
    %c4_19 = arith.constant 4 : index
    %79 = memref.load %arg4[%c4_19] : memref<10xf32, #tpu.memory_space<smem>>
    %80 = vector.broadcast %79 : f32 to vector<1x128xf32>
    %81 = arith.mulf %78, %80 : vector<1x128xf32>
    %82 = arith.addf %66, %81 : vector<1x128xf32>
    %c5 = arith.constant 5 : index
    %83 = memref.load %arg2[%c5] : memref<20xf32, #tpu.memory_space<smem>>
    %84 = vector.broadcast %83 : f32 to vector<1x128xf32>
    %85 = arith.mulf %1, %84 : vector<1x128xf32>
    %c15 = arith.constant 15 : index
    %86 = memref.load %arg2[%c15] : memref<20xf32, #tpu.memory_space<smem>>
    %87 = vector.broadcast %86 : f32 to vector<1x128xf32>
    %88 = arith.mulf %3, %87 : vector<1x128xf32>
    %89 = arith.addf %85, %88 : vector<1x128xf32>
    %c5_20 = arith.constant 5 : index
    %90 = memref.load %arg3[%c5_20] : memref<10xf32, #tpu.memory_space<smem>>
    %91 = vector.broadcast %90 : f32 to vector<1x128xf32>
    %92 = arith.addf %89, %91 : vector<1x128xf32>
    %cst_21 = arith.constant 0.000000e+00 : f32
    %93 = vector.broadcast %cst_21 : f32 to vector<1x128xf32>
    %94 = arith.maximumf %92, %93 : vector<1x128xf32>
    %c5_22 = arith.constant 5 : index
    %95 = memref.load %arg4[%c5_22] : memref<10xf32, #tpu.memory_space<smem>>
    %96 = vector.broadcast %95 : f32 to vector<1x128xf32>
    %97 = arith.mulf %94, %96 : vector<1x128xf32>
    %98 = arith.addf %82, %97 : vector<1x128xf32>
    %c6 = arith.constant 6 : index
    %99 = memref.load %arg2[%c6] : memref<20xf32, #tpu.memory_space<smem>>
    %100 = vector.broadcast %99 : f32 to vector<1x128xf32>
    %101 = arith.mulf %1, %100 : vector<1x128xf32>
    %c16 = arith.constant 16 : index
    %102 = memref.load %arg2[%c16] : memref<20xf32, #tpu.memory_space<smem>>
    %103 = vector.broadcast %102 : f32 to vector<1x128xf32>
    %104 = arith.mulf %3, %103 : vector<1x128xf32>
    %105 = arith.addf %101, %104 : vector<1x128xf32>
    %c6_23 = arith.constant 6 : index
    %106 = memref.load %arg3[%c6_23] : memref<10xf32, #tpu.memory_space<smem>>
    %107 = vector.broadcast %106 : f32 to vector<1x128xf32>
    %108 = arith.addf %105, %107 : vector<1x128xf32>
    %cst_24 = arith.constant 0.000000e+00 : f32
    %109 = vector.broadcast %cst_24 : f32 to vector<1x128xf32>
    %110 = arith.maximumf %108, %109 : vector<1x128xf32>
    %c6_25 = arith.constant 6 : index
    %111 = memref.load %arg4[%c6_25] : memref<10xf32, #tpu.memory_space<smem>>
    %112 = vector.broadcast %111 : f32 to vector<1x128xf32>
    %113 = arith.mulf %110, %112 : vector<1x128xf32>
    %114 = arith.addf %98, %113 : vector<1x128xf32>
    %c7 = arith.constant 7 : index
    %115 = memref.load %arg2[%c7] : memref<20xf32, #tpu.memory_space<smem>>
    %116 = vector.broadcast %115 : f32 to vector<1x128xf32>
    %117 = arith.mulf %1, %116 : vector<1x128xf32>
    %c17 = arith.constant 17 : index
    %118 = memref.load %arg2[%c17] : memref<20xf32, #tpu.memory_space<smem>>
    %119 = vector.broadcast %118 : f32 to vector<1x128xf32>
    %120 = arith.mulf %3, %119 : vector<1x128xf32>
    %121 = arith.addf %117, %120 : vector<1x128xf32>
    %c7_26 = arith.constant 7 : index
    %122 = memref.load %arg3[%c7_26] : memref<10xf32, #tpu.memory_space<smem>>
    %123 = vector.broadcast %122 : f32 to vector<1x128xf32>
    %124 = arith.addf %121, %123 : vector<1x128xf32>
    %cst_27 = arith.constant 0.000000e+00 : f32
    %125 = vector.broadcast %cst_27 : f32 to vector<1x128xf32>
    %126 = arith.maximumf %124, %125 : vector<1x128xf32>
    %c7_28 = arith.constant 7 : index
    %127 = memref.load %arg4[%c7_28] : memref<10xf32, #tpu.memory_space<smem>>
    %128 = vector.broadcast %127 : f32 to vector<1x128xf32>
    %129 = arith.mulf %126, %128 : vector<1x128xf32>
    %130 = arith.addf %114, %129 : vector<1x128xf32>
    %c8 = arith.constant 8 : index
    %131 = memref.load %arg2[%c8] : memref<20xf32, #tpu.memory_space<smem>>
    %132 = vector.broadcast %131 : f32 to vector<1x128xf32>
    %133 = arith.mulf %1, %132 : vector<1x128xf32>
    %c18 = arith.constant 18 : index
    %134 = memref.load %arg2[%c18] : memref<20xf32, #tpu.memory_space<smem>>
    %135 = vector.broadcast %134 : f32 to vector<1x128xf32>
    %136 = arith.mulf %3, %135 : vector<1x128xf32>
    %137 = arith.addf %133, %136 : vector<1x128xf32>
    %c8_29 = arith.constant 8 : index
    %138 = memref.load %arg3[%c8_29] : memref<10xf32, #tpu.memory_space<smem>>
    %139 = vector.broadcast %138 : f32 to vector<1x128xf32>
    %140 = arith.addf %137, %139 : vector<1x128xf32>
    %cst_30 = arith.constant 0.000000e+00 : f32
    %141 = vector.broadcast %cst_30 : f32 to vector<1x128xf32>
    %142 = arith.maximumf %140, %141 : vector<1x128xf32>
    %c8_31 = arith.constant 8 : index
    %143 = memref.load %arg4[%c8_31] : memref<10xf32, #tpu.memory_space<smem>>
    %144 = vector.broadcast %143 : f32 to vector<1x128xf32>
    %145 = arith.mulf %142, %144 : vector<1x128xf32>
    %146 = arith.addf %130, %145 : vector<1x128xf32>
    %c9 = arith.constant 9 : index
    %147 = memref.load %arg2[%c9] : memref<20xf32, #tpu.memory_space<smem>>
    %148 = vector.broadcast %147 : f32 to vector<1x128xf32>
    %149 = arith.mulf %1, %148 : vector<1x128xf32>
    %c19 = arith.constant 19 : index
    %150 = memref.load %arg2[%c19] : memref<20xf32, #tpu.memory_space<smem>>
    %151 = vector.broadcast %150 : f32 to vector<1x128xf32>
    %152 = arith.mulf %3, %151 : vector<1x128xf32>
    %153 = arith.addf %149, %152 : vector<1x128xf32>
    %c9_32 = arith.constant 9 : index
    %154 = memref.load %arg3[%c9_32] : memref<10xf32, #tpu.memory_space<smem>>
    %155 = vector.broadcast %154 : f32 to vector<1x128xf32>
    %156 = arith.addf %153, %155 : vector<1x128xf32>
    %cst_33 = arith.constant 0.000000e+00 : f32
    %157 = vector.broadcast %cst_33 : f32 to vector<1x128xf32>
    %158 = arith.maximumf %156, %157 : vector<1x128xf32>
    %c9_34 = arith.constant 9 : index
    %159 = memref.load %arg4[%c9_34] : memref<10xf32, #tpu.memory_space<smem>>
    %160 = vector.broadcast %159 : f32 to vector<1x128xf32>
    %161 = arith.mulf %158, %160 : vector<1x128xf32>
    %162 = arith.addf %146, %161 : vector<1x128xf32>
    %c0_35 = arith.constant 0 : index
    %163 = memref.load %arg5[%c0_35] : memref<1xf32, #tpu.memory_space<smem>>
    %164 = vector.broadcast %163 : f32 to vector<1x128xf32>
    %165 = arith.addf %162, %164 : vector<1x128xf32>
    %c0_36 = arith.constant 0 : index
    %c0_37 = arith.constant 0 : index
    %c0_38 = arith.constant 0 : index
    %166 = vector.load %arg6[%c0_36, %c0_37, %c0_38] : memref<1x1x128xf32, #tpu.memory_space<vmem>>, vector<1x1x128xf32>
    %167 = vector.shape_cast %166 : vector<1x1x128xf32> to vector<1x128xf32>
    %168 = vector.shape_cast %165 : vector<1x128xf32> to vector<1x1x128xf32>
    tpu.vector_store %arg6[%c0_36, %c0_37, %c0_38], %168 {strides = array<i32>} : memref<1x1x128xf32, #tpu.memory_space<vmem>>, vector<1x1x128xf32>,
    return
  }
  func.func @transform_0(%arg0: i32) -> (i32, i32, i32) {
    %c0_i32 = arith.constant 0 : i32
    %c0_i32_0 = arith.constant 0 : i32
    %c0_i32_1 = arith.constant 0 : i32
    return %c0_i32, %arg0, %c0_i32_0 : i32, i32, i32
  }
  func.func @transform_1(%arg0: i32) -> i32 {
    %c0_i32 = arith.constant 0 : i32
    %c0_i32_0 = arith.constant 0 : i32
    return %c0_i32 : i32
  }
  func.func @transform_2(%arg0: i32) -> i32 {
    %c0_i32 = arith.constant 0 : i32
    %c0_i32_0 = arith.constant 0 : i32
    return %c0_i32 : i32
  }
  func.func @transform_3(%arg0: i32) -> i32 {
    %c0_i32 = arith.constant 0 : i32
    %c0_i32_0 = arith.constant 0 : i32
    return %c0_i32 : i32
  }
  func.func @transform_4(%arg0: i32) -> i32 {
    %c0_i32 = arith.constant 0 : i32
    %c0_i32_0 = arith.constant 0 : i32
    return %c0_i32 : i32
  }
  func.func @transform_5(%arg0: i32) -> (i32, i32, i32) {
    %c0_i32 = arith.constant 0 : i32
    %c0_i32_0 = arith.constant 0 : i32
    %c0_i32_1 = arith.constant 0 : i32
    return %c0_i32, %arg0, %c0_i32_0 : i32, i32, i32
  }
}

</mosaic_0001>

<llo_original>
// kernel: circular_model_forward.1
$region0: #{circular_model_forward.1}
  #allocation0 [shape = 'u32[]', space=smem, size = 0x4, offset = 0x4, fixed_abs, tag = 'smem constant byte address 0x4 - core index']
  #allocation1 [shape = 'u32[144,128]{1,0:T(1,128)}', space=vmem, size = 0x12000, scoped, tag = 'internal scratch']
  #allocation2 [shape = 'f32[1]{0:T(128)S(6)}', space=smem, size = 0x200, scoped, tag = 'scoped memory for circular_model_forward.1']
  %s0 = inlined_call_operand.vmem [shape: f32[2,1,128], index: 0, kind: input, shape index: {}]
  %s1 = inlined_call_operand.vmem [shape: f32[20], index: 1, kind: input, shape index: {}]
  %s2 = inlined_call_operand.vmem [shape: f32[10], index: 2, kind: input, shape index: {}]
  %s3 = inlined_call_operand.vmem [shape: f32[10], index: 3, kind: input, shape index: {}]
  %s4 = inlined_call_operand.<no memory space> [shape: f32[1], index: 4, kind: input, shape index: {}]
  %s5 = inlined_call_operand.vmem [shape: f32[1,1,128], index: 5, kind: output, shape index: {}]
  %s6 = sld [smem:[#allocation0]]
  $region42: #{circular_model_forward.1} parent=0
    _
  %s8 = ssub.s32 1, %s6
  %s9 = scalar_select 0, %s8, %s6
  %10 = sst [smem:[#allocation2]] %s4
  $region1: #{circular_model_forward.1} parent=0
    #allocation3 [shape = 'u8[512]{0}', space=smem, size = 0x200, scoped, tag = 'input window, operand 1, single buffered']
    #allocation4 [shape = 's32[1]{0}', space=sflag, size = 0x4, scoped, tag = 'scoped memory for circular_model_forward.1']
    #allocation5 [shape = 'u8[512]{0}', space=smem, size = 0x200, scoped, tag = 'input window, operand 2, single buffered']
    #allocation6 [shape = 's32[1]{0}', space=sflag, size = 0x4, scoped, tag = 'scoped memory for circular_model_forward.1']
    #allocation7 [shape = 'u8[512]{0}', space=smem, size = 0x200, scoped, tag = 'input window, operand 3, single buffered']
    %11 = vsyncpa [#allocation4], 0
    %12 = vsyncpa [#allocation6], 0
    // Predicated region
    $region2: #{circular_model_forward.1} parent=1 // pred_check
      _
    $region3: #{circular_model_forward.1} parent=1 // pred_check_branch
      %14 = sbr.rel (0) target = $region5
    $region4: #{circular_model_forward.1} parent=1 // pred_region
      _
    $region5: #{circular_model_forward.1} parent=1 // pred_fallthru
      _
    // Predicated region
    $region6: #{circular_model_forward.1} parent=1 // pred_check
      _
    $region7: #{circular_model_forward.1} parent=1 // pred_check_branch
      %16 = sbr.rel (0) target = $region9
    $region8: #{circular_model_forward.1} parent=1 // pred_region
      %s18 = ssub.s32 16, 16
      %19 = vsyncadd [#allocation4], %s18
      %s21 = sshll.u32 %s1, 4
      %s22 = int_to_ptr.vmem [resolvable:$true] %s21
      %24 = dma.vmem_to_smem %s22, 16, [#allocation3], [#allocation4]
    $region9: #{circular_model_forward.1} parent=1 // pred_fallthru
      _
    // Predicated region
    $region10: #{circular_model_forward.1} parent=1 // pred_check
      _
    $region11: #{circular_model_forward.1} parent=1 // pred_check_branch
      %26 = sbr.rel (0) target = $region13
    $region12: #{circular_model_forward.1} parent=1 // pred_region
      %s28 = ssub.s32 16, 16
      %29 = vsyncadd [#allocation6], %s28
      %s31 = sshll.u32 %s2, 4
      %s32 = int_to_ptr.vmem [resolvable:$true] %s31
      %34 = dma.vmem_to_smem %s32, 16, [#allocation5], [#allocation6]
    $region13: #{circular_model_forward.1} parent=1 // pred_fallthru
      _
    // Predicated region
    $region14: #{circular_model_forward.1} parent=1 // pred_check
      _
    $region15: #{circular_model_forward.1} parent=1 // pred_check_branch
      %36 = sbr.rel (0) target = $region17
    $region16: #{circular_model_forward.1} parent=1 // pred_region
      %s38 = ssub.s32 16, 16
      %39 = vsyncadd [#allocation6], %s38
      %s41 = sshll.u32 %s3, 4
      %s42 = int_to_ptr.vmem [resolvable:$true] %s41
      %44 = dma.vmem_to_smem %s42, 16, [#allocation7], [#allocation6]
    $region17: #{circular_model_forward.1} parent=1 // pred_fallthru
      _
    // Predicated region
    $region18: #{circular_model_forward.1} parent=1 // pred_check
      _
    $region19: #{circular_model_forward.1} parent=1 // pred_check_branch
      %46 = sbr.rel (0) target = $region21
    $region20: #{circular_model_forward.1} parent=1 // pred_region
      _
    $region21: #{circular_model_forward.1} parent=1 // pred_fallthru
      _
    // Predicated region
    $region22: #{circular_model_forward.1} parent=1 // pred_check
      _
    $region23: #{circular_model_forward.1} parent=1 // pred_check_branch
      %48 = sbr.rel (0) target = $region25
    $region24: #{circular_model_forward.1} parent=1 // pred_region
      %49 = dma.done [#allocation4], 16
    $region25: #{circular_model_forward.1} parent=1 // pred_fallthru
      _
    // Predicated region
    $region26: #{circular_model_forward.1} parent=1 // pred_check
      _
    $region27: #{circular_model_forward.1} parent=1 // pred_check_branch
      %51 = sbr.rel (0) target = $region29
    $region28: #{circular_model_forward.1} parent=1 // pred_region
      %52 = dma.done [#allocation6], 16
    $region29: #{circular_model_forward.1} parent=1 // pred_fallthru
      _
    // Predicated region
    $region30: #{circular_model_forward.1} parent=1 // pred_check
      _
    $region31: #{circular_model_forward.1} parent=1 // pred_check_branch
      %54 = sbr.rel (0) target = $region33
    $region32: #{circular_model_forward.1} parent=1 // pred_region
      %55 = dma.done [#allocation6], 16
    $region33: #{circular_model_forward.1} parent=1 // pred_fallthru
      _
    %56 = sfence
    %v57 = vld [vmem:[%s0] sm:$0x1]
    %s58 = scalar_lea.vmem %s0, 1
    %v59 = vld [vmem:[%s58] sm:$0x1]
    %s60 = sld [smem:[#allocation3]]
    %v61 = vstv %s60
    %v62 = vmul.f32 %v57, %v61
    %s63 = sld [smem:[#allocation3 + $0xa]]
    %v64 = vstv %s63
    %v65 = vmul.f32 %v59, %v64
    %v66 = vadd.f32 %v62, %v65
    %s67 = sld [smem:[#allocation5]]
    %v68 = vstv %s67
    %v69 = vadd.f32 %v66, %v68
    %v70 = vmax.f32 %v69, 0.0
    %s71 = sld [smem:[#allocation7]]
    %v72 = vstv %s71
    %v73 = vmul.f32 %v70, %v72
    %s74 = sld [smem:[#allocation3 + $0x1]]
    %v75 = vstv %s74
    %v76 = vmul.f32 %v57, %v75
    %s77 = sld [smem:[#allocation3 + $0xb]]
    %v78 = vstv %s77
    %v79 = vmul.f32 %v59, %v78
    %v80 = vadd.f32 %v76, %v79
    %s81 = sld [smem:[#allocation5 + $0x1]]
    %v82 = vstv %s81
    %v83 = vadd.f32 %v80, %v82
    %v84 = vmax.f32 %v83, 0.0
    %s85 = sld [smem:[#allocation7 + $0x1]]
    %v86 = vstv %s85
    %v87 = vmul.f32 %v84, %v86
    %v88 = vadd.f32 %v73, %v87
    %s89 = sld [smem:[#allocation3 + $0x2]]
    %v90 = vstv %s89
    %v91 = vmul.f32 %v57, %v90
    %s92 = sld [smem:[#allocation3 + $0xc]]
    %v93 = vstv %s92
    %v94 = vmul.f32 %v59, %v93
    %v95 = vadd.f32 %v91, %v94
    %s96 = sld [smem:[#allocation5 + $0x2]]
    %v97 = vstv %s96
    %v98 = vadd.f32 %v95, %v97
    %v99 = vmax.f32 %v98, 0.0
    %s100 = sld [smem:[#allocation7 + $0x2]]
    %v101 = vstv %s100
    %v102 = vmul.f32 %v99, %v101
    %v103 = vadd.f32 %v88, %v102
    %s104 = sld [smem:[#allocation3 + $0x3]]
    %v105 = vstv %s104
    %v106 = vmul.f32 %v57, %v105
    %s107 = sld [smem:[#allocation3 + $0xd]]
    %v108 = vstv %s107
    %v109 = vmul.f32 %v59, %v108
    %v110 = vadd.f32 %v106, %v109
    %s111 = sld [smem:[#allocation5 + $0x3]]
    %v112 = vstv %s111
    %v113 = vadd.f32 %v110, %v112
    %v114 = vmax.f32 %v113, 0.0
    %s115 = sld [smem:[#allocation7 + $0x3]]
    %v116 = vstv %s115
    %v117 = vmul.f32 %v114, %v116
    %v118 = vadd.f32 %v103, %v117
    %s119 = sld [smem:[#allocation3 + $0x4]]
    %v120 = vstv %s119
    %v121 = vmul.f32 %v57, %v120
    %s122 = sld [smem:[#allocation3 + $0xe]]
    %v123 = vstv %s122
    %v124 = vmul.f32 %v59, %v123
    %v125 = vadd.f32 %v121, %v124
    %s126 = sld [smem:[#allocation5 + $0x4]]
    %v127 = vstv %s126
    %v128 = vadd.f32 %v125, %v127
    %v129 = vmax.f32 %v128, 0.0
    %s130 = sld [smem:[#allocation7 + $0x4]]
    %v131 = vstv %s130
    %v132 = vmul.f32 %v129, %v131
    %v133 = vadd.f32 %v118, %v132
    %s134 = sld [smem:[#allocation3 + $0x5]]
    %v135 = vstv %s134
    %v136 = vmul.f32 %v57, %v135
    %s137 = sld [smem:[#allocation3 + $0xf]]
    %v138 = vstv %s137
    %v139 = vmul.f32 %v59, %v138
    %v140 = vadd.f32 %v136, %v139
    %s141 = sld [smem:[#allocation5 + $0x5]]
    %v142 = vstv %s141
    %v143 = vadd.f32 %v140, %v142
    %v144 = vmax.f32 %v143, 0.0
    %s145 = sld [smem:[#allocation7 + $0x5]]
    %v146 = vstv %s145
    %v147 = vmul.f32 %v144, %v146
    %v148 = vadd.f32 %v133, %v147
    %s149 = sld [smem:[#allocation3 + $0x6]]
    %v150 = vstv %s149
    %v151 = vmul.f32 %v57, %v150
    %s152 = sld [smem:[#allocation3 + $0x10]]
    %v153 = vstv %s152
    %v154 = vmul.f32 %v59, %v153
    %v155 = vadd.f32 %v151, %v154
    %s156 = sld [smem:[#allocation5 + $0x6]]
    %v157 = vstv %s156
    %v158 = vadd.f32 %v155, %v157
    %v159 = vmax.f32 %v158, 0.0
    %s160 = sld [smem:[#allocation7 + $0x6]]
    %v161 = vstv %s160
    %v162 = vmul.f32 %v159, %v161
    %v163 = vadd.f32 %v148, %v162
    %s164 = sld [smem:[#allocation3 + $0x7]]
    %v165 = vstv %s164
    %v166 = vmul.f32 %v57, %v165
    %s167 = sld [smem:[#allocation3 + $0x11]]
    %v168 = vstv %s167
    %v169 = vmul.f32 %v59, %v168
    %v170 = vadd.f32 %v166, %v169
    %s171 = sld [smem:[#allocation5 + $0x7]]
    %v172 = vstv %s171
    %v173 = vadd.f32 %v170, %v172
    %v174 = vmax.f32 %v173, 0.0
    %s175 = sld [smem:[#allocation7 + $0x7]]
    %v176 = vstv %s175
    %v177 = vmul.f32 %v174, %v176
    %v178 = vadd.f32 %v163, %v177
    %s179 = sld [smem:[#allocation3 + $0x8]]
    %v180 = vstv %s179
    %v181 = vmul.f32 %v57, %v180
    %s182 = sld [smem:[#allocation3 + $0x12]]
    %v183 = vstv %s182
    %v184 = vmul.f32 %v59, %v183
    %v185 = vadd.f32 %v181, %v184
    %s186 = sld [smem:[#allocation5 + $0x8]]
    %v187 = vstv %s186
    %v188 = vadd.f32 %v185, %v187
    %v189 = vmax.f32 %v188, 0.0
    %s190 = sld [smem:[#allocation7 + $0x8]]
    %v191 = vstv %s190
    %v192 = vmul.f32 %v189, %v191
    %v193 = vadd.f32 %v178, %v192
    %s194 = sld [smem:[#allocation3 + $0x9]]
    %v195 = vstv %s194
    %v196 = vmul.f32 %v57, %v195
    %s197 = sld [smem:[#allocation3 + $0x13]]
    %v198 = vstv %s197
    %v199 = vmul.f32 %v59, %v198
    %v200 = vadd.f32 %v196, %v199
    %s201 = sld [smem:[#allocation5 + $0x9]]
    %v202 = vstv %s201
    %v203 = vadd.f32 %v200, %v202
    %v204 = vmax.f32 %v203, 0.0
    %s205 = sld [smem:[#allocation7 + $0x9]]
    %v206 = vstv %s205
    %v207 = vmul.f32 %v204, %v206
    %v208 = vadd.f32 %v193, %v207
    %s209 = sld [smem:[#allocation2]]
    %v210 = vstv %s209
    %v211 = vadd.f32 %v208, %v210
    %212 = vst [vmem:[%s5] sm:$0x1] %v211
    // Predicated region
    $region34: #{circular_model_forward.1} parent=1 // pred_check
      _
    $region35: #{circular_model_forward.1} parent=1 // pred_check_branch
      %214 = sbr.rel (0) target = $region37
    $region36: #{circular_model_forward.1} parent=1 // pred_region
      _
    $region37: #{circular_model_forward.1} parent=1 // pred_fallthru
      _
    // Predicated region
    $region38: #{circular_model_forward.1} parent=1 // pred_check
      _
    $region39: #{circular_model_forward.1} parent=1 // pred_check_branch
      %216 = sbr.rel (0) target = $region41
    $region40: #{circular_model_forward.1} parent=1 // pred_region
      _
    $region41: #{circular_model_forward.1} parent=1 // pred_fallthru
      _
    %217 = vsyncpa [#allocation4], 1
    %218 = vsyncpa [#allocation6], 1

</llo_original>
